<compile_context>
chip_gen: v6e
topology: v6e:2x2x1
jax: 0.10.0
libtpu: 0.0.40
codegen_flags: <defaults>
</compile_context>

<pallas_src>
import functools

import jax
import jax.numpy as jnp
from jax.experimental import pallas as pl
from jax.experimental.pallas import tpu as pltpu


def _dense_block_kernel(x_ref, w_ref, p_ref, o_ref, *,
                        ksize, tl, num_t, slope, fold_scale):
    """Fused conv1d + LeakyReLU + BatchNorm1d (eval) on one (batch, L-tile).

    x_ref: [1, Cin, Lp]      bf16  (padded input, resident across L-tiles)
    w_ref: [K, Cout, Cin]    bf16  (conv weight, optionally pre-scaled by BN scale)
    p_ref: [Cout, 3]         f32   (col 0: bias, col 1: BN scale, col 2: BN shift)
    o_ref: [1, Cout, tl]     out dtype
    """
    cout = o_ref.shape[1]

    if num_t == 1:
        # Single L-tile: the whole padded window (width tl + K - 1) is the tile.
        x_win = x_ref[0]
    else:
        # tl is a multiple of 128 in this branch -> 128-aligned lane slice.
        toff = pl.multiple_of(pl.program_id(1) * tl, 128)
        x_win = x_ref[0, :, pl.ds(toff, tl + ksize - 1)]

    # K shifted taps, K small MXU matmuls, f32 accumulation.
    acc = jnp.zeros((cout, tl), jnp.float32)
    for k in range(ksize):
        acc += jnp.dot(w_ref[k], x_win[:, k:k + tl],
                       preferred_element_type=jnp.float32)

    acc = acc + p_ref[:, 0:1]                         # conv bias (maybe BN-scaled)
    acc = jnp.where(acc >= 0.0, acc, slope * acc)     # LeakyReLU(0.2)
    if not fold_scale:
        acc = acc * p_ref[:, 1:2]                     # BN scale (general fallback)
    acc = acc + p_ref[:, 2:3]                         # BN shift
    # Dropout(0.1) is identity at inference.
    o_ref[0] = acc.astype(o_ref.dtype)


def dense_block_forward(x, conv_w, conv_b, bn_w, bn_b, bn_mean, bn_var, *,
                        padding=1, eps=1e-5, slope=0.2, tl_max=1024,
                        out_dtype=jnp.bfloat16):
    """x: [N, C_in, L] -> [N, C_out, L_out]; matches PyTorch DenseBlock.forward (eval)."""
    n, cin, length = x.shape
    cout, _, ksize = conv_w.shape
    lout = length + 2 * padding - ksize + 1
    assert lout >= 1

    # ---- L-tile selection: lane-dense (128-aligned) tiles when possible ----
    if lout <= 128:
        tl = lout                                   # single short tile (full-dim block)
    else:
        tl = min(tl_max, (lout // 128) * 128)       # largest 128-multiple <= lout, capped
        if n == 1 and tl >= lout:
            # Split the L axis so v7x's two TensorCores both get a parallel step.
            tl = max(128, min((lout // 128) * 128,
                              ((lout // 2 + 127) // 128) * 128))
    num_t = -(-lout // tl)                          # cdiv

    # ---- pad time axis once (conv halo + tile halo) and cast to bf16 ----
    lp = num_t * tl + ksize - 1                     # >= L + 2*padding
    x_pad = jnp.pad(x, ((0, 0), (0, 0), (padding, lp - length - padding)))
    x_pad = x_pad.astype(jnp.bfloat16)

    # ---- fold BatchNorm1d (eval) into scale/shift ----
    scale = bn_w * jax.lax.rsqrt(bn_var + eps)
    shift = bn_b - bn_mean * scale
    try:
        # LeakyReLU is positively homogeneous: if every scale > 0, fold it into
        # the conv weight/bias and skip the per-element multiply in-kernel.
        fold_scale = bool(jnp.all(scale > 0.0))
    except Exception:
        fold_scale = False
    if fold_scale:
        w_eff = conv_w * scale[:, None, None]
        b_eff = conv_b * scale
    else:
        w_eff, b_eff = conv_w, conv_b

    w_t = jnp.transpose(w_eff, (2, 0, 1)).astype(jnp.bfloat16)            # [K, Cout, Cin]
    params = jnp.stack([b_eff, scale, shift], axis=1).astype(jnp.float32)  # [Cout, 3]

    kernel = functools.partial(_dense_block_kernel, ksize=ksize, tl=tl,
                               num_t=num_t, slope=slope, fold_scale=fold_scale)

    out_itemsize = jnp.dtype(out_dtype).itemsize
    cost = pl.CostEstimate(
        flops=2 * n * lout * ksize * cin * cout,
        transcendentals=0,
        bytes_accessed=(x_pad.size * 2 + w_t.size * 2 + params.size * 4
                        + n * cout * lout * out_itemsize),
    )

    # Double-buffered per-step VMEM budget; only override the scoped limit when the
    # blocks would not fit the smallest default (v5e 16 MiB scoped, v7x 32 MiB).
    blk_bytes = (2 * cin * lp * 2 + 2 * ksize * cout * cin * 2 + 2 * cout * 3 * 4
                 + 2 * cout * tl * out_itemsize)
    vmem_limit = None
    if blk_bytes > 12 * 2**20:
        vmem_limit = int(min(48 * 2**20, 2 * blk_bytes))

    out = pl.pallas_call(
        kernel,
        out_shape=jax.ShapeDtypeStruct((n, cout, lout), out_dtype),
        grid_spec=pltpu.PrefetchScalarGridSpec(
            num_scalar_prefetch=0,
            grid=(n, num_t),
            in_specs=[
                # Padded input: resident across L-tiles (same block index over t).
                pl.BlockSpec((1, cin, lp), lambda b, t: (b, 0, 0)),
                pl.BlockSpec((ksize, cout, cin), lambda b, t: (0, 0, 0)),
                pl.BlockSpec((cout, 3), lambda b, t: (0, 0)),
            ],
            out_specs=pl.BlockSpec((1, cout, tl), lambda b, t: (b, 0, t)),
        ),
        compiler_params=pltpu.CompilerParams(
            dimension_semantics=("parallel", "parallel"),
            vmem_limit_bytes=vmem_limit),
        cost_estimate=cost,
    )(x_pad, w_t, params)

    return out


def _reference(x, conv_w, conv_b, bn_w, bn_b, bn_mean, bn_var,
               *, padding=1, eps=1e-5, slope=0.2):
    """Plain-JAX f32 reference of the PyTorch forward (eval mode)."""
    y = jax.lax.conv_general_dilated(
        x, conv_w, window_strides=(1,), padding=[(padding, padding)],
        dimension_numbers=("NCH", "OIH", "NCH"))
    y = y + conv_b[None, :, None]
    y = jnp.where(y >= 0.0, y, slope * y)
    y = ((y - bn_mean[None, :, None])
         * jax.lax.rsqrt(bn_var[None, :, None] + eps)
         * bn_w[None, :, None] + bn_b[None, :, None])
    return y


def init_params(key, input_size, num_filters, kernel_size):
    """Deterministic init matching DenseBlock.__init__ shapes/schemes."""
    k_w, k_b = jax.random.split(key)
    fan_in = input_size * kernel_size
    std = (2.0 / fan_in) ** 0.5          # kaiming_normal_, fan_in, gain=sqrt(2)
    conv_w = std * jax.random.normal(
        k_w, (num_filters, input_size, kernel_size), dtype=jnp.float32)
    bound = 1.0 / (fan_in ** 0.5)        # Conv1d default bias init
    conv_b = jax.random.uniform(k_b, (num_filters,), jnp.float32, -bound, bound)
    bn_w = jnp.ones((num_filters,), jnp.float32)
    bn_b = jnp.zeros((num_filters,), jnp.float32)
    bn_mean = jnp.zeros((num_filters,), jnp.float32)
    bn_var = jnp.ones((num_filters,), jnp.float32)
    return conv_w, conv_b, bn_w, bn_b, bn_mean, bn_var


if __name__ == "__main__":
    # DenseBlock(input_size=4, num_filters=8, kernel_size=3); x: [N=2, C_in=4, L=16]
    input_size, num_filters, kernel_size = 4, 8, 3
    n, length = 2, 16

    key = jax.random.PRNGKey(0)
    k_x, k_p = jax.random.split(key)
    x = jax.random.normal(k_x, (n, input_size, length), dtype=jnp.float32)
    params = init_params(k_p, input_size, num_filters, kernel_size)

    out = dense_block_forward(x, *params)
    out = jax.block_until_ready(out)

    assert out.shape == (n, num_filters, length), out.shape
    assert bool(jnp.all(jnp.isfinite(out)))

    # Loose tolerance: matmul inputs and the stored output are bf16 (f32 accumulate).
    ref = _reference(x, *params)
    out_f32 = out.astype(jnp.float32)
    assert bool(jnp.allclose(out_f32, ref, atol=5e-2, rtol=2e-2)), \
        f"max abs error {float(jnp.max(jnp.abs(out_f32 - ref)))}"

    print("KERNEL_OK")
</pallas_src>

<mosaic_0001>
module attributes {stable_mosaic.version = 11 : i64} {
  func.func @_dense_block_kernel(%arg0: i32, %arg1: i32, %arg2: memref<1x4x18xbf16, #tpu.memory_space<vmem>>, %arg3: memref<3x8x4xbf16, #tpu.memory_space<vmem>>, %arg4: memref<8x3xf32, #tpu.memory_space<vmem>>, %arg5: memref<1x8x16xbf16, #tpu.memory_space<vmem>>) attributes {dimension_semantics = [#tpu.dimension_semantics<parallel>, #tpu.dimension_semantics<parallel>], iteration_bounds = array<i64: 2, 1>, scalar_prefetch = 0 : i64, scratch_operands = 0 : i64, tpu.core_type = #tpu.core_type<tc>, window_params = [{transform_indices = @transform_0, window_bounds = array<i64: 1, 4, 18>}, {pipeline_mode = #tpu.pipeline_mode<synchronous>, transform_indices = @transform_1, window_bounds = array<i64: 3, 8, 4>}, {pipeline_mode = #tpu.pipeline_mode<synchronous>, transform_indices = @transform_2, window_bounds = array<i64: 8, 3>}, {transform_indices = @transform_3, window_bounds = array<i64: 1, 8, 16>}]} {
    %c0 = arith.constant 0 : index
    %c0_0 = arith.constant 0 : index
    %c0_1 = arith.constant 0 : index
    %0 = vector.load %arg2[%c0, %c0_0, %c0_1] : memref<1x4x18xbf16, #tpu.memory_space<vmem>>, vector<1x4x18xbf16>
    %1 = vector.shape_cast %0 : vector<1x4x18xbf16> to vector<4x18xbf16>
    %cst = arith.constant 0.000000e+00 : f32
    %2 = vector.broadcast %cst : f32 to vector<8x16xf32>
    %c0_2 = arith.constant 0 : index
    %c0_3 = arith.constant 0 : index
    %c0_4 = arith.constant 0 : index
    %3 = vector.load %arg3[%c0_2, %c0_3, %c0_4] : memref<3x8x4xbf16, #tpu.memory_space<vmem>>, vector<1x8x4xbf16>
    %4 = vector.shape_cast %3 : vector<1x8x4xbf16> to vector<8x4xbf16>
    %5 = vector.extract_strided_slice %1 {offsets = [0, 0], sizes = [4, 16], strides = [1, 1]} : vector<4x18xbf16> to vector<4x16xbf16>
    %cst_5 = arith.constant dense<0.000000e+00> : vector<8x16xf32>
    %6 = tpu.matmul %4, %5, %cst_5 {dimension_numbers = #tpu.dot_dimension_numbers<[1], [0], [0], [1], [0, 0, 1, 1], [], []>} : vector<8x4xbf16>, vector<4x16xbf16>, vector<8x16xf32> -> vector<8x16xf32>
    %7 = arith.addf %2, %6 : vector<8x16xf32>
    %c1 = arith.constant 1 : index
    %c0_6 = arith.constant 0 : index
    %c0_7 = arith.constant 0 : index
    %8 = vector.load %arg3[%c1, %c0_6, %c0_7] : memref<3x8x4xbf16, #tpu.memory_space<vmem>>, vector<1x8x4xbf16>
    %9 = vector.shape_cast %8 : vector<1x8x4xbf16> to vector<8x4xbf16>
    %10 = vector.extract_strided_slice %1 {offsets = [0, 1], sizes = [4, 16], strides = [1, 1]} : vector<4x18xbf16> to vector<4x16xbf16>
    %cst_8 = arith.constant dense<0.000000e+00> : vector<8x16xf32>
    %11 = tpu.matmul %9, %10, %cst_8 {dimension_numbers = #tpu.dot_dimension_numbers<[1], [0], [0], [1], [0, 0, 1, 1], [], []>} : vector<8x4xbf16>, vector<4x16xbf16>, vector<8x16xf32> -> vector<8x16xf32>
    %12 = arith.addf %7, %11 : vector<8x16xf32>
    %c2 = arith.constant 2 : index
    %c0_9 = arith.constant 0 : index
    %c0_10 = arith.constant 0 : index
    %13 = vector.load %arg3[%c2, %c0_9, %c0_10] : memref<3x8x4xbf16, #tpu.memory_space<vmem>>, vector<1x8x4xbf16>
    %14 = vector.shape_cast %13 : vector<1x8x4xbf16> to vector<8x4xbf16>
    %15 = vector.extract_strided_slice %1 {offsets = [0, 2], sizes = [4, 16], strides = [1, 1]} : vector<4x18xbf16> to vector<4x16xbf16>
    %cst_11 = arith.constant dense<0.000000e+00> : vector<8x16xf32>
    %16 = tpu.matmul %14, %15, %cst_11 {dimension_numbers = #tpu.dot_dimension_numbers<[1], [0], [0], [1], [0, 0, 1, 1], [], []>} : vector<8x4xbf16>, vector<4x16xbf16>, vector<8x16xf32> -> vector<8x16xf32>
    %17 = arith.addf %12, %16 : vector<8x16xf32>
    %c0_12 = arith.constant 0 : index
    %c0_13 = arith.constant 0 : index
    %18 = vector.load %arg4[%c0_12, %c0_13] : memref<8x3xf32, #tpu.memory_space<vmem>>, vector<8x1xf32>
    %19 = vector.broadcast %18 : vector<8x1xf32> to vector<8x16xf32>
    %20 = arith.addf %17, %19 : vector<8x16xf32>
    %cst_14 = arith.constant 0.000000e+00 : f32
    %21 = vector.broadcast %cst_14 : f32 to vector<8x16xf32>
    %22 = arith.cmpf oge, %20, %21 : vector<8x16xf32>
    %cst_15 = arith.constant 2.000000e-01 : f32
    %23 = vector.broadcast %cst_15 : f32 to vector<8x16xf32>
    %24 = arith.mulf %23, %20 : vector<8x16xf32>
    %25 = arith.select %22, %20, %24 : vector<8x16xi1>, vector<8x16xf32>
    %c0_16 = arith.constant 0 : index
    %c2_17 = arith.constant 2 : index
    %26 = vector.load %arg4[%c0_16, %c2_17] : memref<8x3xf32, #tpu.memory_space<vmem>>, vector<8x1xf32>
    %27 = vector.broadcast %26 : vector<8x1xf32> to vector<8x16xf32>
    %28 = arith.addf %25, %27 : vector<8x16xf32>
    %29 = arith.truncf %28 : vector<8x16xf32> to vector<8x16xbf16>
    %c0_18 = arith.constant 0 : index
    %c0_19 = arith.constant 0 : index
    %c0_20 = arith.constant 0 : index
    %30 = vector.load %arg5[%c0_18, %c0_19, %c0_20] : memref<1x8x16xbf16, #tpu.memory_space<vmem>>, vector<1x8x16xbf16>
    %31 = vector.shape_cast %30 : vector<1x8x16xbf16> to vector<8x16xbf16>
    %32 = vector.shape_cast %29 : vector<8x16xbf16> to vector<1x8x16xbf16>
    tpu.vector_store %arg5[%c0_18, %c0_19, %c0_20], %32 {strides = array<i32>} : memref<1x8x16xbf16, #tpu.memory_space<vmem>>, vector<1x8x16xbf16>,
    return
  }
  func.func @transform_0(%arg0: i32, %arg1: i32) -> (i32, i32, i32) {
    %c0_i32 = arith.constant 0 : i32
    %c0_i32_0 = arith.constant 0 : i32
    %c0_i32_1 = arith.constant 0 : i32
    return %arg0, %c0_i32, %c0_i32_0 : i32, i32, i32
  }
  func.func @transform_1(%arg0: i32, %arg1: i32) -> (i32, i32, i32) {
    %c0_i32 = arith.constant 0 : i32
    %c0_i32_0 = arith.constant 0 : i32
    %c0_i32_1 = arith.constant 0 : i32
    %c0_i32_2 = arith.constant 0 : i32
    return %c0_i32, %c0_i32_0, %c0_i32_1 : i32, i32, i32
  }
  func.func @transform_2(%arg0: i32, %arg1: i32) -> (i32, i32) {
    %c0_i32 = arith.constant 0 : i32
    %c0_i32_0 = arith.constant 0 : i32
    %c0_i32_1 = arith.constant 0 : i32
    return %c0_i32, %c0_i32_0 : i32, i32
  }
  func.func @transform_3(%arg0: i32, %arg1: i32) -> (i32, i32, i32) {
    %c0_i32 = arith.constant 0 : i32
    %c0_i32_0 = arith.constant 0 : i32
    return %arg0, %c0_i32, %arg1 : i32, i32, i32
  }
}

</mosaic_0001>

<llo_original>
// kernel: tpu_custom_call.1
$region0: #{tpu_custom_call.1}
  #allocation0 [shape = 'u32[]', space=smem, size = 0x4, offset = 0x4, fixed_abs, tag = 'smem constant byte address 0x4 - core index']
  #allocation1 [shape = 'u32[144,128]{1,0:T(1,128)}', space=vmem, size = 0x12000, scoped, tag = 'internal scratch']
  %s0 = inlined_call_operand.vmem [shape: bf16[2,4,18], index: 0, kind: input, shape index: {}]
  %s1 = inlined_call_operand.vmem [shape: bf16[3,8,4], index: 1, kind: input, shape index: {}]
  %s2 = inlined_call_operand.vmem [shape: f32[8,3], index: 2, kind: input, shape index: {}]
  %s3 = inlined_call_operand.hbm [shape: bf16[2,8,16], index: 3, kind: output, shape index: {}]
  %s4 = sld [smem:[#allocation0]]
  $region45: #{tpu_custom_call.1} parent=0
    _
  %s6 = ssub.s32 1, %s4
  %s7 = scalar_select 0, %s6, %s4
  $region1: #{tpu_custom_call.1} parent=0
    #allocation2 [shape = 'u8[4096]{0}', space=vmem, size = 0x1000, scoped, tag = 'output window, operand 0']
    #allocation3 [shape = 's32[2]{0}', space=sflag, size = 0x8, scoped, tag = 'scoped memory for tpu_custom_call.1']
    %8 = vsyncpa [#allocation3], 0
    %s9 = scalar_lea.sflag [#allocation3], 1
    %10 = vsyncpa %s9, 0
    loop: start=0, step=1, limit=4
    $region2: #{tpu_custom_call.1} parent=1 // loop_pre_header
      _
    $region3: #{tpu_custom_call.1} parent=1 // loop_header
      %s12 = sphi 0, %s16
      %p13 = scmp.ge.s32.totalorder %s12, 4
      %s19 = sphi 0, %s31
      %s20 = sphi 0, %s27
      %s21 = sphi 0, %s19
      %s22 = sphi 0, %s20
      %s23 = sphi 0, %s21
      %s24 = sphi 0, %s22
      %s34 = sphi 0, %s36
      %s37 = sphi 0, %s34
      %s38 = sphi 0, %s37
      %s54 = sphi 0, %s38
      %s58 = sphi 0, %s58
      %s60 = sphi 0, %s58
      %s61 = sphi 0, %s60
      %s75 = sphi 0, %s61
      %s79 = sphi 0, %s79
      %s81 = sphi 0, %s79
      %s82 = sphi 0, %s81
      %s96 = sphi 0, %s82
      %s104 = sphi 0, %s106
      %s107 = sphi 0, %s104
      %s108 = sphi 0, %s107
      %s124 = sphi 0, %s108
    $region4: #{tpu_custom_call.1} parent=1 // loop_header_branch
      %15 = sbr.rel (%p13) target = $region8
    $region5: #{tpu_custom_call.1} parent=1 // loop_body
      %s17 = ssub.s32 %s12, 1
      %s18 = ssub.s32 %s12, 2
      %s25 = sadd.s32 1, %s20
      %p26 = scmp.ge.s32.totalorder %s25, 1
      %s27 = scalar_select %p26, 0, %s25
      %s28 = sadd.s32 1, %s19
      %s29 = scalar_select %p26, %s28, %s19
      %p30 = scmp.ge.s32.totalorder %s29, 2
      %s31 = scalar_select %p30, 0, %s29
      %s32 = ssub.s32 %s19, %s31
      %p33 = scmp.eq.s32.totalorder %s32, 0
      %s35 = sadd.s32 %s34, 1
      %s36 = scalar_select %p33, %s34, %s35
      %p39 = pneg %p33
      %p40 = scmp.eq.s32.totalorder %s12, 1
      %p41 = por %p39, %p40
      %p42 = scmp.ne.s32.totalorder %s34, %s37
      %p43 = scmp.eq.s32.totalorder %s12, 0
      %p44 = por %p42, %p43
      %p45 = scmp.ne.s32.totalorder %s34, %s37
      %p46 = scmp.eq.s32.totalorder %s17, 1
      %p47 = por %p45, %p46
      %p48 = scmp.ne.s32.totalorder %s37, %s38
      %p49 = scmp.eq.s32.totalorder %s17, 0
      %p50 = por %p48, %p49
      %p51 = scmp.ne.s32.totalorder %s37, %s38
      %p52 = scmp.eq.s32.totalorder %s18, 1
      %p53 = por %p51, %p52
      %p55 = scmp.ne.s32.totalorder %s38, %s54
      %p56 = scmp.eq.s32.totalorder %s18, 0
      %p57 = por %p55, %p56
      %s59 = sadd.s32 %s58, 1
      %p62 = scmp.eq.s32.totalorder %s12, 1
      %p63 = scmp.ne.s32.totalorder %s58, %s60
      %p64 = scmp.eq.s32.totalorder %s12, 0
      %p65 = por %p63, %p64
      %p66 = scmp.ne.s32.totalorder %s58, %s60
      %p67 = scmp.eq.s32.totalorder %s17, 1
      %p68 = por %p66, %p67
      %p69 = scmp.ne.s32.totalorder %s60, %s61
      %p70 = scmp.eq.s32.totalorder %s17, 0
      %p71 = por %p69, %p70
      %p72 = scmp.ne.s32.totalorder %s60, %s61
      %p73 = scmp.eq.s32.totalorder %s18, 1
      %p74 = por %p72, %p73
      %p76 = scmp.ne.s32.totalorder %s61, %s75
      %p77 = scmp.eq.s32.totalorder %s18, 0
      %p78 = por %p76, %p77
      %s80 = sadd.s32 %s79, 1
      %p83 = scmp.eq.s32.totalorder %s12, 1
      %p84 = scmp.ne.s32.totalorder %s79, %s81
      %p85 = scmp.eq.s32.totalorder %s12, 0
      %p86 = por %p84, %p85
      %p87 = scmp.ne.s32.totalorder %s79, %s81
      %p88 = scmp.eq.s32.totalorder %s17, 1
      %p89 = por %p87, %p88
      %p90 = scmp.ne.s32.totalorder %s81, %s82
      %p91 = scmp.eq.s32.totalorder %s17, 0
      %p92 = por %p90, %p91
      %p93 = scmp.ne.s32.totalorder %s81, %s82
      %p94 = scmp.eq.s32.totalorder %s18, 1
      %p95 = por %p93, %p94
      %p97 = scmp.ne.s32.totalorder %s82, %s96
      %p98 = scmp.eq.s32.totalorder %s18, 0
      %p99 = por %p97, %p98
      %s100 = ssub.s32 %s19, %s31
      %s101 = ssub.s32 %s20, %s27
      %s102 = sor.u32 %s100, %s101
      %p103 = scmp.eq.s32.totalorder %s102, 0
      %s105 = sadd.s32 %s104, 1
      %s106 = scalar_select %p103, %s104, %s105
      %p109 = pneg %p103
      %p110 = scmp.eq.s32.totalorder %s12, 1
      %p111 = por %p109, %p110
      %p112 = scmp.ne.s32.totalorder %s104, %s107
      %p113 = scmp.eq.s32.totalorder %s12, 0
      %p114 = por %p112, %p113
      %p115 = scmp.ne.s32.totalorder %s104, %s107
      %p116 = scmp.eq.s32.totalorder %s17, 1
      %p117 = por %p115, %p116
      %p118 = scmp.ne.s32.totalorder %s107, %s108
      %p119 = scmp.eq.s32.totalorder %s17, 0
      %p120 = por %p118, %p119
      %p121 = scmp.ne.s32.totalorder %s107, %s108
      %p122 = scmp.eq.s32.totalorder %s18, 1
      %p123 = por %p121, %p122
      %p125 = scmp.ne.s32.totalorder %s108, %s124
      %p126 = scmp.eq.s32.totalorder %s18, 0
      %p127 = por %p125, %p126
      %p128 = scmp.le.s32.totalorder 1, %s12
      %p129 = scmp.lt.s32.totalorder %s12, 3
      %p130 = pnand %p128, %p129
      %p131 = pneg %p130
      // Predicated region
      $region9: #{tpu_custom_call.1} parent=5 // pred_check
        _
      $region10: #{tpu_custom_call.1} parent=5 // pred_check_branch
        %133 = sbr.rel (%p130) target = $region12
      $region11: #{tpu_custom_call.1} parent=5 // pred_region
        %s134 = ssub.s32 %s12, 1
        // Predicated region
        $region13: #{tpu_custom_call.1} parent=11 // pred_check
          %p135 = pneg %p71
        $region14: #{tpu_custom_call.1} parent=11 // pred_check_branch
          %137 = sbr.rel (%p135) target = $region16
        $region15: #{tpu_custom_call.1} parent=11 // pred_region
          _
        $region16: #{tpu_custom_call.1} parent=11 // pred_fallthru
          _
        // Predicated region
        $region17: #{tpu_custom_call.1} parent=11 // pred_check
          %p138 = pneg %p92
        $region18: #{tpu_custom_call.1} parent=11 // pred_check_branch
          %140 = sbr.rel (%p138) target = $region20
        $region19: #{tpu_custom_call.1} parent=11 // pred_region
          _
        $region20: #{tpu_custom_call.1} parent=11 // pred_fallthru
          _
      $region12: #{tpu_custom_call.1} parent=5 // pred_fallthru
        _
      %p141 = scmp.lt.s32.totalorder %s12, 2
      // Predicated region
      $region21: #{tpu_custom_call.1} parent=5 // pred_check
        %p142 = pneg %p141
      $region22: #{tpu_custom_call.1} parent=5 // pred_check_branch
        %144 = sbr.rel (%p142) target = $region24
      $region23: #{tpu_custom_call.1} parent=5 // pred_region
        // Predicated region
        $region25: #{tpu_custom_call.1} parent=23 // pred_check
          %p145 = pneg %p44
        $region26: #{tpu_custom_call.1} parent=23 // pred_check_branch
          %147 = sbr.rel (%p145) target = $region28
        $region27: #{tpu_custom_call.1} parent=23 // pred_region
          %p148 = scmp.lt.s32.totalorder %s19, 1
          %s149 = scalar_select %p148, %s19, 1
          %s150 = smul.addr %s149, 2
          %s151 = scalar_lea.vmem %s0, %s150
        $region28: #{tpu_custom_call.1} parent=23 // pred_fallthru
          _
      $region24: #{tpu_custom_call.1} parent=5 // pred_fallthru
        _
      %p152 = scmp.le.s32.totalorder 1, %s12
      %p153 = scmp.lt.s32.totalorder %s12, 3
      %p154 = pnand %p152, %p153
      %p155 = pneg %p154
      // Predicated region
      $region29: #{tpu_custom_call.1} parent=5 // pred_check
        _
      $region30: #{tpu_custom_call.1} parent=5 // pred_check_branch
        %157 = sbr.rel (%p154) target = $region32
      $region31: #{tpu_custom_call.1} parent=5 // pred_region
        %s158 = ssub.s32 %s12, 1
        %p159 = scmp.lt.s32.totalorder %s21, 1
        %s160 = scalar_select %p159, %s21, 1
        %s161 = smul.addr %s160, 2
        %s162 = scalar_lea.vmem %s0, %s161
        %p163 = pneg %p50
        %p164 = pneg %p47
        %p165 = pneg %p71
        %p166 = pneg %p68
        %p167 = pneg %p92
        %p168 = pneg %p89
        %p169 = pneg %p120
        %p170 = pneg %p117
        %s171 = sand.u32 %s107, 1
        %s172 = scalar_lea.sflag [#allocation3], %s171
        %s173 = sand.u32 %s107, 1
        %s174 = smul.addr %s173, 4
        %s175 = scalar_lea.vmem [#allocation2], %s174
        %p176 = scmp.lt.s32.totalorder %s21, 1
        %s177 = scalar_select %p176, %s21, 1
        %s178 = smul.addr %s177, 2
        %s179 = scalar_lea.vmem %s0, %s178
        %v181 = vld [vmem:[%s179] sm:$0x3]
        %v182 = vld [vmem:[%s1] sm:$0xf]
        %s183 = scalar_lea.vmem %s1, 4
        %v184 = vld [vmem:[%s183] sm:$0xf]
        %v187 = vunpack.c.l.s4 1983009808
        %v188 = vunpack.c.0.s8 %v187
        %v189 = vlaneseq
        %v190 = vshrl.u32 %v189, 7
        %v191 = vsub.s32 %v188, %v190
        %v192 = vrot.slane %v181, %v191
        %193 = vrot.lane.b32.xlu0 %v192, 127
        %v194 = vpop.permute.xlu0 %193
        %vm195 = vcmask 31744
        %v197 = vsel %vm195, %v184, 0
        %vm199 = vcmask 1041408
        %v201 = vsel %vm199, %v194, 0
        %203 = vmatprep.subr.bf16.mxu0 0
        %204 = vmatpush1.bf16.msra.mxu0 0
        %205 = vmatprep.subr.bf16.mxu0 0
        %206 = vmatpush1.bf16.msra.mxu0 0
        %207 = vmatprep.subr.bf16.mxu0 0
        %208 = vmatpush1.bf16.msra.mxu0 0
        %209 = vmatprep.subr.bf16.mxu0 0
        %210 = vmatpush1.bf16.msra.mxu0 0
        %211 = vmatprep.subr.bf16.mxu0 0
        %212 = vmatpush1.bf16.msra.mxu0 0
        %213 = vmatprep.subr.bf16.mxu0 0
        %214 = vmatpush1.bf16.msra.mxu0 0
        %215 = vmatprep.subr.bf16.mxu0 0
        %216 = vmatpush1.bf16.msra.mxu0 0
        %217 = vmatprep.subr.bf16.mxu0 0
        %218 = vmatpush1.bf16.msra.mxu0 %v201
        %219 = vmatprep.subr.bf16.mxu0 0
        %220 = vmatpush2.bf16.msra.mxu0 0
        %221 = vmatprep.subr.bf16.mxu0 0
        %222 = vmatpush2.bf16.msra.mxu0 0
        %223 = vmatprep.subr.bf16.mxu0 0
        %224 = vmatpush2.bf16.msra.mxu0 0
        %225 = vmatprep.subr.bf16.mxu0 0
        %226 = vmatpush2.bf16.msra.mxu0 0
        %227 = vmatprep.subr.bf16.mxu0 0
        %228 = vmatpush2.bf16.msra.mxu0 0
        %229 = vmatprep.subr.bf16.mxu0 0
        %230 = vmatpush2.bf16.msra.mxu0 0
        %231 = vmatprep.subr.bf16.mxu0 0
        %232 = vmatpush2.bf16.msra.mxu0 0
        %233 = vmatprep.subr.bf16.mxu0 0
        %234 = vmatpush2.bf16.msra.mxu0 0
        %235 = vmatprep.mubr.bf16.mxu0 0
        %236 = vmatmul.mubr.bf16.gmra.mxu0 %v197
        %v237 = vpop.f32.mrf.mxu0
        %v238 = vadd.f32 0.0, %v237
        %v239 = vpop.f32.mrf.mxu0
        %v240 = vpop.f32.mrf.mxu0
        %v241 = vpop.f32.mrf.mxu0
        %242 = vdwg.mxu0
        %v244 = vsel %vm195, %v182, 0
        %v247 = vsel %vm199, %v181, 0
        %249 = vmatprep.subr.bf16.mxu0 0
        %250 = vmatpush1.bf16.msra.mxu0 0
        %251 = vmatprep.subr.bf16.mxu0 0
        %252 = vmatpush1.bf16.msra.mxu0 0
        %253 = vmatprep.subr.bf16.mxu0 0
        %254 = vmatpush1.bf16.msra.mxu0 0
        %255 = vmatprep.subr.bf16.mxu0 0
        %256 = vmatpush1.bf16.msra.mxu0 0
        %257 = vmatprep.subr.bf16.mxu0 0
        %258 = vmatpush1.bf16.msra.mxu0 0
        %259 = vmatprep.subr.bf16.mxu0 0
        %260 = vmatpush1.bf16.msra.mxu0 0
        %261 = vmatprep.subr.bf16.mxu0 0
        %262 = vmatpush1.bf16.msra.mxu0 0
        %263 = vmatprep.subr.bf16.mxu0 0
        %264 = vmatpush1.bf16.msra.mxu0 %v247
        %265 = vmatprep.subr.bf16.mxu0 0
        %266 = vmatpush2.bf16.msra.mxu0 0
        %267 = vmatprep.subr.bf16.mxu0 0
        %268 = vmatpush2.bf16.msra.mxu0 0
        %269 = vmatprep.subr.bf16.mxu0 0
        %270 = vmatpush2.bf16.msra.mxu0 0
        %271 = vmatprep.subr.bf16.mxu0 0
        %272 = vmatpush2.bf16.msra.mxu0 0
        %273 = vmatprep.subr.bf16.mxu0 0
        %274 = vmatpush2.bf16.msra.mxu0 0
        %275 = vmatprep.subr.bf16.mxu0 0
        %276 = vmatpush2.bf16.msra.mxu0 0
        %277 = vmatprep.subr.bf16.mxu0 0
        %278 = vmatpush2.bf16.msra.mxu0 0
        %279 = vmatprep.subr.bf16.mxu0 0
        %280 = vmatpush2.bf16.msra.mxu0 0
        %281 = vmatprep.mubr.bf16.mxu0 0
        %282 = vmatmul.mubr.bf16.gmra.mxu0 %v244
        %v283 = vpop.f32.mrf.mxu0
        %v284 = vadd.f32 %v238, %v283
        %v285 = vpop.f32.mrf.mxu0
        %v286 = vpop.f32.mrf.mxu0
        %v287 = vpop.f32.mrf.mxu0
        %288 = vdwg.mxu0
        %s289 = scalar_lea.vmem %s1, 8
        %v290 = vld [vmem:[%s289] sm:$0xf]
        %291 = vrot.lane.b32.xlu0 %v192, 126
        %v292 = vpop.permute.xlu0 %291
        %v294 = vsel %vm195, %v290, 0
        %v297 = vsel %vm199, %v292, 0
        %299 = vmatprep.subr.bf16.mxu0 0
        %300 = vmatpush1.bf16.msra.mxu0 0
        %301 = vmatprep.subr.bf16.mxu0 0
        %302 = vmatpush1.bf16.msra.mxu0 0
        %303 = vmatprep.subr.bf16.mxu0 0
        %304 = vmatpush1.bf16.msra.mxu0 0
        %305 = vmatprep.subr.bf16.mxu0 0
        %306 = vmatpush1.bf16.msra.mxu0 0
        %307 = vmatprep.subr.bf16.mxu0 0
        %308 = vmatpush1.bf16.msra.mxu0 0
        %309 = vmatprep.subr.bf16.mxu0 0
        %310 = vmatpush1.bf16.msra.mxu0 0
        %311 = vmatprep.subr.bf16.mxu0 0
        %312 = vmatpush1.bf16.msra.mxu0 0
        %313 = vmatprep.subr.bf16.mxu0 0
        %314 = vmatpush1.bf16.msra.mxu0 %v297
        %315 = vmatprep.subr.bf16.mxu0 0
        %316 = vmatpush2.bf16.msra.mxu0 0
        %317 = vmatprep.subr.bf16.mxu0 0
        %318 = vmatpush2.bf16.msra.mxu0 0
        %319 = vmatprep.subr.bf16.mxu0 0
        %320 = vmatpush2.bf16.msra.mxu0 0
        %321 = vmatprep.subr.bf16.mxu0 0
        %322 = vmatpush2.bf16.msra.mxu0 0
        %323 = vmatprep.subr.bf16.mxu0 0
        %324 = vmatpush2.bf16.msra.mxu0 0
        %325 = vmatprep.subr.bf16.mxu0 0
        %326 = vmatpush2.bf16.msra.mxu0 0
        %327 = vmatprep.subr.bf16.mxu0 0
        %328 = vmatpush2.bf16.msra.mxu0 0
        %329 = vmatprep.subr.bf16.mxu0 0
        %330 = vmatpush2.bf16.msra.mxu0 0
        %331 = vmatprep.mubr.bf16.mxu0 0
        %332 = vmatmul.mubr.bf16.gmra.mxu0 %v294
        %v333 = vpop.f32.mrf.mxu0
        %v334 = vadd.f32 0.0, %v333
        %v335 = vpop.f32.mrf.mxu0
        %v336 = vpop.f32.mrf.mxu0
        %v337 = vpop.f32.mrf.mxu0
        %338 = vdwg.mxu0
        %v339 = vadd.f32 %v284, %v334
        %v340 = vld [vmem:[%s2] sm:$0xff]
        %342 = vset.pattern.permute.xlu0 0
        %343 = vperm.xlu0 %342, %v340
        %v344 = vpop.permute.xlu0 %343
        %v346 = vadd.f32 %v339, %v344
        %vm347 = vcmp.ge.f32.partialorder %v346, 0.0
        %v348 = vmul.f32 %v346, 0.2
        %v349 = vsel %vm347, %v346, %v348
        %350 = vset.pattern.permute.xlu0 2
        %351 = vperm.xlu0 %350, %v340
        %v352 = vpop.permute.xlu0 %351
        %v354 = vadd.f32 %v349, %v352
        %v355 = vpack.c.bf16 %v354, %v354
        %vm356 = vcmask 125952
        %357 = vst.msk [vmem:[%s175] sm:$0xf] %vm356, %v355
        %s358 = sand.u32 %s107, 1
        %s359 = scalar_lea.sflag [#allocation3], %s358
        %s360 = sand.u32 %s107, 1
        %s361 = smul.addr %s360, 4
        %s362 = scalar_lea.vmem [#allocation2], %s361
        // Predicated region
        $region33: #{tpu_custom_call.1} parent=31 // pred_check
          %p363 = pneg %p117
        $region34: #{tpu_custom_call.1} parent=31 // pred_check_branch
          %365 = sbr.rel (%p363) target = $region36
        $region35: #{tpu_custom_call.1} parent=31 // pred_region
          %s367 = ssub.s32 64, 64
          %368 = vsyncadd %s359, %s367
          %s369 = sadd.s32 %s22, %s21
          %s370 = smul.addr %s369, 64
          %s371 = scalar_lea.hbm %s3, %s370
          %s373 = sshll.u32 %s362, 4
          %s374 = int_to_ptr.vmem [resolvable:$true] %s373
          %376 = dma.vmem_to_hbm [thread:$0]  %s374, 64, %s371, %s359
        $region36: #{tpu_custom_call.1} parent=31 // pred_fallthru
          _
      $region32: #{tpu_custom_call.1} parent=5 // pred_fallthru
        _
      %p377 = scmp.le.s32.totalorder 2, %s12
      // Predicated region
      $region37: #{tpu_custom_call.1} parent=5 // pred_check
        %p378 = pneg %p377
      $region38: #{tpu_custom_call.1} parent=5 // pred_check_branch
        %380 = sbr.rel (%p378) target = $region40
      $region39: #{tpu_custom_call.1} parent=5 // pred_region
        %s381 = ssub.s32 %s12, 2
        // Predicated region
        $region41: #{tpu_custom_call.1} parent=39 // pred_check
          %p382 = pneg %p123
        $region42: #{tpu_custom_call.1} parent=39 // pred_check_branch
          %384 = sbr.rel (%p382) target = $region44
        $region43: #{tpu_custom_call.1} parent=39 // pred_region
          %s385 = sand.u32 %s108, 1
          %s386 = scalar_lea.sflag [#allocation3], %s385
          %s387 = sand.u32 %s108, 1
          %s388 = smul.addr %s387, 4
          %s389 = scalar_lea.vmem [#allocation2], %s388
          %390 = dma.done %s386, 64
        $region44: #{tpu_custom_call.1} parent=39 // pred_fallthru
          _
      $region40: #{tpu_custom_call.1} parent=5 // pred_fallthru
        _
    $region6: #{tpu_custom_call.1} parent=1 // loop_footer
      %s16 = sadd.s32 1, %s12
    $region7: #{tpu_custom_call.1} parent=1 // loop_footer_branch
      %11 = sbr.rel target = $region3
    $region8: #{tpu_custom_call.1} parent=1 // loop_exit
      _
    %391 = vsyncpa [#allocation3], 1
    %s392 = scalar_lea.sflag [#allocation3], 1
    %393 = vsyncpa %s392, 1

</llo_original>
